<compile_context>
chip_gen: v6e
topology: v6e:2x2x1
jax: 0.10.0
libtpu: 0.0.40
codegen_flags: <defaults>
</compile_context>

<pallas_src>
import functools

import jax
import jax.numpy as jnp
from jax.experimental import pallas as pl
from jax.experimental.pallas import tpu as pltpu


def _round_up(x: int, m: int) -> int:
    return ((x + m - 1) // m) * m


# --------------------------------------------------------------------------
# Pallas kernel: pool the original sentence, apply all K greedy prefix-trials,
# emit lane-dense cosine similarities + across-batch acceptance mask.
# --------------------------------------------------------------------------
def _sentiment_gate_kernel(emb_ref, tok_ref, cand_ref, old_ref, sim_ref, ok_ref,
                           *, num_cand, seq_len, batch, vocab, lanes, inv_seq,
                           threshold):
    f32 = jnp.float32
    emb = emb_ref[...]                                            # (V, D) f32
    tok = tok_ref[...]                                            # (B, S) i32

    # ---- mean-pool the ORIGINAL sentence: one-hot counts @ table on the MXU --
    v_iota = jax.lax.broadcasted_iota(jnp.int32, (batch, vocab), 1)       # (B, V)
    counts = jnp.zeros((batch, vocab), f32)
    for s in range(seq_len):                                      # static, S small
        counts = counts + (tok[:, s:s + 1] == v_iota).astype(f32)
    a = jnp.dot(counts, emb, preferred_element_type=f32) * inv_seq        # (B, D)

    # ---- gather candidate / replaced-token rows via one-hot MXU matmuls ------
    kv_iota = jax.lax.broadcasted_iota(jnp.int32, (num_cand, vocab), 1)
    cand_rows = jnp.dot((cand_ref[...] == kv_iota).astype(f32), emb,
                        preferred_element_type=f32)               # (K, D)
    kbv_iota = jax.lax.broadcasted_iota(jnp.int32, (num_cand * batch, vocab), 1)
    old_rows = jnp.dot((old_ref[...] == kbv_iota).astype(f32), emb,
                       preferred_element_type=f32)                # (K*B, D)

    # ---- greedy prefix trials: incremental pooled-embedding update -----------
    norm_a = jnp.maximum(
        jnp.sqrt(jnp.sum(a * a, axis=-1, keepdims=True)), 1e-8)   # (B, 1)
    lane_iota = jax.lax.broadcasted_iota(jnp.int32, (batch, lanes), 1)
    sim = jnp.zeros((batch, lanes), f32)                          # lane-dense out
    m = a
    for k in range(num_cand):                                     # static, K small
        delta = (cand_rows[k:k + 1, :]
                 - old_rows[k * batch:(k + 1) * batch, :]) * inv_seq      # (B, D)
        m = m + delta
        dot = jnp.sum(a * m, axis=-1, keepdims=True)              # (B, 1)
        norm_m = jnp.maximum(
            jnp.sqrt(jnp.sum(m * m, axis=-1, keepdims=True)), 1e-8)
        sim = jnp.where(lane_iota == k, dot / (norm_a * norm_m), sim)

    sim_ref[...] = sim                                            # single full-tile store
    # Across-batch acceptance computed in-kernel; host reads back only this.
    ok_ref[...] = jnp.min((sim >= threshold).astype(jnp.int32),
                          axis=0, keepdims=True)                  # (1, lanes)


@functools.lru_cache(maxsize=None)
def _build_gate_call(batch, seq_len, vocab, dim, num_cand, threshold):
    lanes = _round_up(max(num_cand, 1), 128)
    kernel = functools.partial(
        _sentiment_gate_kernel, num_cand=num_cand, seq_len=seq_len, batch=batch,
        vocab=vocab, lanes=lanes, inv_seq=1.0 / float(seq_len),
        threshold=float(threshold))
    vmem = pl.BlockSpec(memory_space=pltpu.MemorySpace.VMEM)      # whole array in VMEM
    return pl.pallas_call(
        kernel,
        out_shape=(jax.ShapeDtypeStruct((batch, lanes), jnp.float32),
                   jax.ShapeDtypeStruct((1, lanes), jnp.int32)),
        in_specs=[vmem, vmem, vmem, vmem],
        out_specs=(vmem, vmem),
    )


def evaluate_candidates(emb_table, token_ids, cand_ids, old_ids, *, threshold=0.85):
    """Evaluate all K greedy prefix-trials in ONE kernel launch.

    cand_ids : int32 [K]    candidate replacement token id per greedy step
    old_ids  : int32 [K, B] token id being replaced, per batch row
    Returns (sim [K, B] f32, ok [K] int32); trial k applies candidates 0..k.
    """
    emb_table = jnp.asarray(emb_table, dtype=jnp.float32)
    token_ids = jnp.asarray(token_ids, dtype=jnp.int32)
    cand_ids = jnp.asarray(cand_ids, dtype=jnp.int32)
    old_ids = jnp.asarray(old_ids, dtype=jnp.int32)
    K = int(cand_ids.shape[0])
    B, S = token_ids.shape
    V, D = emb_table.shape
    call = _build_gate_call(B, S, V, D, K, float(threshold))
    sim, ok = call(emb_table, token_ids, cand_ids.reshape(K, 1),
                   old_ids.reshape(K * B, 1))
    return jnp.transpose(sim[:, :K]), ok[0, :K]


# --------------------------------------------------------------------------
# Pure-JAX reference (for validation only).
# --------------------------------------------------------------------------
def _reference_sims(emb_table, token_ids, cand_ids, old_ids):
    emb = jnp.take(emb_table, token_ids, axis=0)                  # [B, S, D]
    a = jnp.mean(emb, axis=1)                                     # [B, D]
    S = token_ids.shape[1]
    norm_a = jnp.maximum(jnp.linalg.norm(a, axis=-1), 1e-8)
    m = a
    sims = []
    for k in range(int(cand_ids.shape[0])):
        delta = (emb_table[cand_ids[k]][None, :]
                 - jnp.take(emb_table, old_ids[k], axis=0)) / S
        m = m + delta
        dot = jnp.sum(a * m, axis=-1)
        norm_m = jnp.maximum(jnp.linalg.norm(m, axis=-1), 1e-8)
        sims.append(dot / (norm_a * norm_m))
    return jnp.stack(sims)                                        # [K, B]


class SentimentModifierNN:
    """JAX/Pallas port: the greedy meaning-preservation gate over candidate
    replacements runs as ONE Pallas kernel launch + ONE host readback; the
    token/string bookkeeping stays in Python, mirroring the PyTorch greedy
    control flow on synthetic token ids."""

    def __init__(self, vocab_size: int = 256, embed_dim: int = 128, seed: int = 0):
        key = jax.random.PRNGKey(seed)
        # TODO(synk): at realistic vocab sizes store the table in bf16 and cast
        # gathered rows to f32 in-kernel (halves VMEM footprint; matters on v7x).
        self.embedding_table = jax.random.normal(
            key, (vocab_size, embed_dim), dtype=jnp.float32) * 0.1
        self.vocab_size = vocab_size
        self.embed_dim = embed_dim

    def forward(self, token_ids, tokens_to_modify, word_sentiments, replacement_ids,
                threshold=0.85):
        """
        token_ids        : int32 [B, S] tokenised phrase (batched synthetic phrases)
        tokens_to_modify : dict {position -> original token id}
        word_sentiments  : dict {position -> sentiment score (float)}
        replacement_ids  : dict {position -> candidate lower-sentiment token id}
        Returns the `replacements` dict (position -> accepted token id).
        """
        # TODO(synk): synonym search / string tokenisation has no Pallas
        # equivalent; positions + candidate replacement ids arrive as token ids.
        replacements = dict(tokens_to_modify)
        if not word_sentiments:
            return replacements

        token_ids = jnp.asarray(token_ids, dtype=jnp.int32)
        # Greedy order of the original while-loop: highest |sentiment| first,
        # stop at the first candidate that breaks meaning preservation.
        order = sorted(word_sentiments.items(), key=lambda x: abs(x[1]), reverse=True)
        positions = [p for p, _ in order]
        cand_list = [int(replacement_ids[p]) for p in positions]

        pos_idx = jnp.asarray(positions, dtype=jnp.int32)
        old_ids = jnp.transpose(token_ids[:, pos_idx])                    # [K, B]
        cand_ids = jnp.asarray(cand_list, dtype=jnp.int32)                # [K]

        # One kernel launch (pooling + all candidate trials), one tiny readback.
        _sim, ok = evaluate_candidates(
            self.embedding_table, token_ids, cand_ids, old_ids, threshold=threshold)
        ok_host = jax.device_get(ok)                                      # [K] int32
        for k, pos in enumerate(positions):
            if int(ok_host[k]) == 1:
                replacements[pos] = cand_list[k]
            else:
                break
        return replacements

    __call__ = forward


if __name__ == "__main__":
    B, S, D, V = 8, 8, 128, 256

    model = SentimentModifierNN(vocab_size=V, embed_dim=D, seed=0)

    key = jax.random.PRNGKey(0)
    k_tok, k_rep = jax.random.split(key)
    token_ids = jax.random.randint(k_tok, (B, S), 0, V, dtype=jnp.int32)

    # Synthetic sentiment-laden positions, sentiments and candidate replacements.
    tokens_to_modify = {1: int(token_ids[0, 1]), 4: int(token_ids[0, 4])}
    word_sentiments = {1: 0.9, 4: -0.6}
    replacement_ids = {
        1: int(jax.random.randint(k_rep, (), 0, V)),
        4: int(jax.random.randint(jax.random.fold_in(k_rep, 1), (), 0, V)),
    }

    # --- Smoke test: replacing a token with itself (zero delta) must give
    # cosine similarity ~1.0 for every batch row. ---
    cand_ids = jnp.array([5], dtype=jnp.int32)
    old_ids = jnp.full((1, B), 5, dtype=jnp.int32)
    sim, ok = evaluate_candidates(model.embedding_table, token_ids, cand_ids,
                                  old_ids, threshold=0.85)
    sim = jax.block_until_ready(sim)
    assert sim.shape == (1, B)
    assert bool(jnp.all(jnp.abs(sim - 1.0) < 1e-3))
    assert bool(jnp.all(ok == 1))

    # --- Pure-JAX reference check on the actual greedy candidates. ---
    order = sorted(word_sentiments.items(), key=lambda x: abs(x[1]), reverse=True)
    positions = [p for p, _ in order]
    cand = jnp.asarray([replacement_ids[p] for p in positions], dtype=jnp.int32)
    old = jnp.transpose(token_ids[:, jnp.asarray(positions, dtype=jnp.int32)])
    sim_k, _ok_k = evaluate_candidates(model.embedding_table, token_ids, cand, old,
                                       threshold=0.85)
    sim_ref = _reference_sims(model.embedding_table, token_ids, cand, old)
    sim_k = jax.block_until_ready(sim_k)
    assert bool(jnp.max(jnp.abs(sim_k - sim_ref)) < 2e-2)

    # --- Full forward (greedy replacement gate). ---
    replacements = model(token_ids, tokens_to_modify, word_sentiments, replacement_ids)
    assert isinstance(replacements, dict)

    print("KERNEL_OK")
</pallas_src>

<mosaic_0001>
module attributes {stable_mosaic.version = 11 : i64} {
  func.func @_sentiment_gate_kernel(%arg0: memref<256x128xf32, #tpu.memory_space<vmem>>, %arg1: memref<8x8xi32, #tpu.memory_space<vmem>>, %arg2: memref<1x1xi32, #tpu.memory_space<vmem>>, %arg3: memref<8x1xi32, #tpu.memory_space<vmem>>, %arg4: memref<8x128xf32, #tpu.memory_space<vmem>>, %arg5: memref<1x128xi32, #tpu.memory_space<vmem>>) attributes {dimension_semantics = [], scalar_prefetch = 0 : i64, scratch_operands = 0 : i64, tpu.core_type = #tpu.core_type<tc>} {
    %c0 = arith.constant 0 : index
    %c0_0 = arith.constant 0 : index
    %0 = vector.load %arg0[%c0, %c0_0] : memref<256x128xf32, #tpu.memory_space<vmem>>, vector<256x128xf32>
    %c0_1 = arith.constant 0 : index
    %c0_2 = arith.constant 0 : index
    %1 = vector.load %arg1[%c0_1, %c0_2] : memref<8x8xi32, #tpu.memory_space<vmem>>, vector<8x8xi32>
    %2 = tpu.iota {dimensions = array<i32: 1>} : vector<8x256xi32>
    %cst = arith.constant 0.000000e+00 : f32
    %3 = vector.broadcast %cst : f32 to vector<8x256xf32>
    %4 = vector.extract_strided_slice %1 {offsets = [0, 0], sizes = [8, 1], strides = [1, 1]} : vector<8x8xi32> to vector<8x1xi32>
    %5 = vector.broadcast %4 : vector<8x1xi32> to vector<8x256xi32>
    %6 = arith.cmpi eq, %5, %2 : vector<8x256xi32>
    %7 = arith.extui %6 : vector<8x256xi1> to vector<8x256xi32>
    %8 = arith.sitofp %7 : vector<8x256xi32> to vector<8x256xf32>
    %9 = arith.addf %3, %8 : vector<8x256xf32>
    %10 = vector.extract_strided_slice %1 {offsets = [0, 1], sizes = [8, 1], strides = [1, 1]} : vector<8x8xi32> to vector<8x1xi32>
    %11 = vector.broadcast %10 : vector<8x1xi32> to vector<8x256xi32>
    %12 = arith.cmpi eq, %11, %2 : vector<8x256xi32>
    %13 = arith.extui %12 : vector<8x256xi1> to vector<8x256xi32>
    %14 = arith.sitofp %13 : vector<8x256xi32> to vector<8x256xf32>
    %15 = arith.addf %9, %14 : vector<8x256xf32>
    %16 = vector.extract_strided_slice %1 {offsets = [0, 2], sizes = [8, 1], strides = [1, 1]} : vector<8x8xi32> to vector<8x1xi32>
    %17 = vector.broadcast %16 : vector<8x1xi32> to vector<8x256xi32>
    %18 = arith.cmpi eq, %17, %2 : vector<8x256xi32>
    %19 = arith.extui %18 : vector<8x256xi1> to vector<8x256xi32>
    %20 = arith.sitofp %19 : vector<8x256xi32> to vector<8x256xf32>
    %21 = arith.addf %15, %20 : vector<8x256xf32>
    %22 = vector.extract_strided_slice %1 {offsets = [0, 3], sizes = [8, 1], strides = [1, 1]} : vector<8x8xi32> to vector<8x1xi32>
    %23 = vector.broadcast %22 : vector<8x1xi32> to vector<8x256xi32>
    %24 = arith.cmpi eq, %23, %2 : vector<8x256xi32>
    %25 = arith.extui %24 : vector<8x256xi1> to vector<8x256xi32>
    %26 = arith.sitofp %25 : vector<8x256xi32> to vector<8x256xf32>
    %27 = arith.addf %21, %26 : vector<8x256xf32>
    %28 = vector.extract_strided_slice %1 {offsets = [0, 4], sizes = [8, 1], strides = [1, 1]} : vector<8x8xi32> to vector<8x1xi32>
    %29 = vector.broadcast %28 : vector<8x1xi32> to vector<8x256xi32>
    %30 = arith.cmpi eq, %29, %2 : vector<8x256xi32>
    %31 = arith.extui %30 : vector<8x256xi1> to vector<8x256xi32>
    %32 = arith.sitofp %31 : vector<8x256xi32> to vector<8x256xf32>
    %33 = arith.addf %27, %32 : vector<8x256xf32>
    %34 = vector.extract_strided_slice %1 {offsets = [0, 5], sizes = [8, 1], strides = [1, 1]} : vector<8x8xi32> to vector<8x1xi32>
    %35 = vector.broadcast %34 : vector<8x1xi32> to vector<8x256xi32>
    %36 = arith.cmpi eq, %35, %2 : vector<8x256xi32>
    %37 = arith.extui %36 : vector<8x256xi1> to vector<8x256xi32>
    %38 = arith.sitofp %37 : vector<8x256xi32> to vector<8x256xf32>
    %39 = arith.addf %33, %38 : vector<8x256xf32>
    %40 = vector.extract_strided_slice %1 {offsets = [0, 6], sizes = [8, 1], strides = [1, 1]} : vector<8x8xi32> to vector<8x1xi32>
    %41 = vector.broadcast %40 : vector<8x1xi32> to vector<8x256xi32>
    %42 = arith.cmpi eq, %41, %2 : vector<8x256xi32>
    %43 = arith.extui %42 : vector<8x256xi1> to vector<8x256xi32>
    %44 = arith.sitofp %43 : vector<8x256xi32> to vector<8x256xf32>
    %45 = arith.addf %39, %44 : vector<8x256xf32>
    %46 = vector.extract_strided_slice %1 {offsets = [0, 7], sizes = [8, 1], strides = [1, 1]} : vector<8x8xi32> to vector<8x1xi32>
    %47 = vector.broadcast %46 : vector<8x1xi32> to vector<8x256xi32>
    %48 = arith.cmpi eq, %47, %2 : vector<8x256xi32>
    %49 = arith.extui %48 : vector<8x256xi1> to vector<8x256xi32>
    %50 = arith.sitofp %49 : vector<8x256xi32> to vector<8x256xf32>
    %51 = arith.addf %45, %50 : vector<8x256xf32>
    %cst_3 = arith.constant dense<0.000000e+00> : vector<8x128xf32>
    %52 = tpu.matmul %51, %0, %cst_3 {dimension_numbers = #tpu.dot_dimension_numbers<[1], [0], [0], [1], [0, 0, 1, 1], [], []>} : vector<8x256xf32>, vector<256x128xf32>, vector<8x128xf32> -> vector<8x128xf32>
    %cst_4 = arith.constant 1.250000e-01 : f32
    %53 = vector.broadcast %cst_4 : f32 to vector<8x128xf32>
    %54 = arith.mulf %52, %53 : vector<8x128xf32>
    %55 = tpu.iota {dimensions = array<i32: 1>} : vector<1x256xi32>
    %c0_5 = arith.constant 0 : index
    %c0_6 = arith.constant 0 : index
    %56 = vector.load %arg2[%c0_5, %c0_6] : memref<1x1xi32, #tpu.memory_space<vmem>>, vector<1x1xi32>
    %57 = vector.broadcast %56 : vector<1x1xi32> to vector<1x256xi32>
    %58 = arith.cmpi eq, %57, %55 : vector<1x256xi32>
    %59 = arith.extui %58 : vector<1x256xi1> to vector<1x256xi32>
    %60 = arith.sitofp %59 : vector<1x256xi32> to vector<1x256xf32>
    %cst_7 = arith.constant dense<0.000000e+00> : vector<1x128xf32>
    %61 = tpu.matmul %60, %0, %cst_7 {dimension_numbers = #tpu.dot_dimension_numbers<[1], [0], [0], [1], [0, 0, 1, 1], [], []>} : vector<1x256xf32>, vector<256x128xf32>, vector<1x128xf32> -> vector<1x128xf32>
    %62 = tpu.iota {dimensions = array<i32: 1>} : vector<8x256xi32>
    %c0_8 = arith.constant 0 : index
    %c0_9 = arith.constant 0 : index
    %63 = vector.load %arg3[%c0_8, %c0_9] : memref<8x1xi32, #tpu.memory_space<vmem>>, vector<8x1xi32>
    %64 = vector.broadcast %63 : vector<8x1xi32> to vector<8x256xi32>
    %65 = arith.cmpi eq, %64, %62 : vector<8x256xi32>
    %66 = arith.extui %65 : vector<8x256xi1> to vector<8x256xi32>
    %67 = arith.sitofp %66 : vector<8x256xi32> to vector<8x256xf32>
    %cst_10 = arith.constant dense<0.000000e+00> : vector<8x128xf32>
    %68 = tpu.matmul %67, %0, %cst_10 {dimension_numbers = #tpu.dot_dimension_numbers<[1], [0], [0], [1], [0, 0, 1, 1], [], []>} : vector<8x256xf32>, vector<256x128xf32>, vector<8x128xf32> -> vector<8x128xf32>
    %69 = arith.mulf %54, %54 : vector<8x128xf32>
    %cst_11 = arith.constant dense<0.000000e+00> : vector<8xf32>
    %70 = vector.multi_reduction <add>, %69, %cst_11 [1] : vector<8x128xf32> to vector<8xf32>
    %71 = vector.shape_cast %70 : vector<8xf32> to vector<8x1xf32>
    %72 = math.sqrt %71 : vector<8x1xf32>
    %cst_12 = arith.constant 9.99999993E-9 : f32
    %73 = vector.broadcast %cst_12 : f32 to vector<8x1xf32>
    %74 = arith.maximumf %72, %73 : vector<8x1xf32>
    %75 = tpu.iota {dimensions = array<i32: 1>} : vector<8x128xi32>
    %cst_13 = arith.constant 0.000000e+00 : f32
    %76 = vector.broadcast %cst_13 : f32 to vector<8x128xf32>
    %77 = vector.broadcast %61 : vector<1x128xf32> to vector<8x128xf32>
    %78 = arith.subf %77, %68 : vector<8x128xf32>
    %cst_14 = arith.constant 1.250000e-01 : f32
    %79 = vector.broadcast %cst_14 : f32 to vector<8x128xf32>
    %80 = arith.mulf %78, %79 : vector<8x128xf32>
    %81 = arith.addf %54, %80 : vector<8x128xf32>
    %82 = arith.mulf %54, %81 : vector<8x128xf32>
    %cst_15 = arith.constant dense<0.000000e+00> : vector<8xf32>
    %83 = vector.multi_reduction <add>, %82, %cst_15 [1] : vector<8x128xf32> to vector<8xf32>
    %84 = vector.shape_cast %83 : vector<8xf32> to vector<8x1xf32>
    %85 = arith.mulf %81, %81 : vector<8x128xf32>
    %cst_16 = arith.constant dense<0.000000e+00> : vector<8xf32>
    %86 = vector.multi_reduction <add>, %85, %cst_16 [1] : vector<8x128xf32> to vector<8xf32>
    %87 = vector.shape_cast %86 : vector<8xf32> to vector<8x1xf32>
    %88 = math.sqrt %87 : vector<8x1xf32>
    %cst_17 = arith.constant 9.99999993E-9 : f32
    %89 = vector.broadcast %cst_17 : f32 to vector<8x1xf32>
    %90 = arith.maximumf %88, %89 : vector<8x1xf32>
    %c0_i32 = arith.constant 0 : i32
    %91 = vector.broadcast %c0_i32 : i32 to vector<8x128xi32>
    %92 = arith.cmpi eq, %75, %91 : vector<8x128xi32>
    %93 = arith.mulf %74, %90 : vector<8x1xf32>
    %94 = arith.divf %84, %93 : vector<8x1xf32>
    %95 = vector.shape_cast %94 : vector<8x1xf32> to vector<8x1xf32>
    %96 = vector.broadcast %95 : vector<8x1xf32> to vector<8x128xf32>
    %97 = arith.select %92, %96, %76 : vector<8x128xi1>, vector<8x128xf32>
    %c0_18 = arith.constant 0 : index
    %c0_19 = arith.constant 0 : index
    %98 = vector.load %arg4[%c0_18, %c0_19] : memref<8x128xf32, #tpu.memory_space<vmem>>, vector<8x128xf32>
    tpu.vector_store %arg4[%c0_18, %c0_19], %97 {strides = array<i32>} : memref<8x128xf32, #tpu.memory_space<vmem>>, vector<8x128xf32>,
    %cst_20 = arith.constant 8.500000e-01 : f32
    %99 = vector.broadcast %cst_20 : f32 to vector<8x128xf32>
    %100 = arith.cmpf oge, %97, %99 : vector<8x128xf32>
    %101 = arith.extui %100 : vector<8x128xi1> to vector<8x128xi32>
    %cst_21 = arith.constant dense<2147483647> : vector<128xi32>
    %102 = vector.multi_reduction <minsi>, %101, %cst_21 [0] : vector<8x128xi32> to vector<128xi32>
    %103 = vector.shape_cast %102 : vector<128xi32> to vector<1x128xi32>
    %c0_22 = arith.constant 0 : index
    %c0_23 = arith.constant 0 : index
    %104 = vector.load %arg5[%c0_22, %c0_23] : memref<1x128xi32, #tpu.memory_space<vmem>>, vector<1x128xi32>
    tpu.vector_store %arg5[%c0_22, %c0_23], %103 {strides = array<i32>} : memref<1x128xi32, #tpu.memory_space<vmem>>, vector<1x128xi32>,
    return
  }
}

</mosaic_0001>

<llo_original>
// kernel: tpu_custom_call.1
$region0: #{tpu_custom_call.1}
  #allocation0 [shape = 'u32[]', space=smem, size = 0x4, offset = 0x4, fixed_abs, tag = 'smem constant byte address 0x4 - core index']
  #allocation1 [shape = 'u32[144,128]{1,0:T(1,128)}', space=vmem, size = 0x12000, scoped, tag = 'internal scratch']
  #allocation2 [shape = 's32[1,1]{1,0:T(1,128)S(1)}', space=vmem, size = 0x200, scoped, tag = 'scoped memory for tpu_custom_call.1']
  %s0 = inlined_call_operand.hbm [shape: f32[256,128], index: 0, kind: input, shape index: {}]
  %s1 = inlined_call_operand.vmem [shape: s32[8,8], index: 1, kind: input, shape index: {}]
  %s2 = inlined_call_operand.<no memory space> [shape: s32[1,1], index: 2, kind: input, shape index: {}]
  %s3 = inlined_call_operand.vmem [shape: s32[8,1], index: 3, kind: input, shape index: {}]
  %s4 = inlined_call_operand.hbm [shape: f32[8,128], index: 4, kind: output, shape index: {0}]
  %s5 = inlined_call_operand.hbm [shape: s32[1,128], index: 5, kind: output, shape index: {1}]
  %6 = xla_tuple %s4, %s5
  %s7 = sld [smem:[#allocation0]]
  $region38: #{tpu_custom_call.1} parent=0
    _
  %s9 = ssub.s32 1, %s7
  %s10 = scalar_select 0, %s9, %s7
  %v11 = vstv %s2
  %12 = vst [vmem:[#allocation2] sm:$0x1] %v11
  $region1: #{tpu_custom_call.1} parent=0
    #allocation3 [shape = 'u8[131072]{0}', space=vmem, size = 0x20000, scoped, tag = 'input window, operand 0, single buffered']
    #allocation4 [shape = 's32[1]{0}', space=sflag, size = 0x4, scoped, tag = 'scoped memory for tpu_custom_call.1']
    #allocation5 [shape = 's32[1]{0}', space=sflag, size = 0x4, scoped, tag = 'scoped memory for tpu_custom_call.1']
    #allocation6 [shape = 'u8[4096]{0}', space=vmem, size = 0x1000, scoped, tag = 'output window, operand 0, single buffered']
    #allocation7 [shape = 'u8[512]{0}', space=vmem, size = 0x400, scoped, tag = 'output window, operand 1, single buffered']
    #allocation8 [shape = 's32[1]{0}', space=sflag, size = 0x4, scoped, tag = 'scoped memory for tpu_custom_call.1']
    %13 = vsyncpa [#allocation4], 0
    %14 = vsyncpa [#allocation5], 0
    %15 = vsyncpa [#allocation8], 0
    // Predicated region
    $region2: #{tpu_custom_call.1} parent=1 // pred_check
      _
    $region3: #{tpu_custom_call.1} parent=1 // pred_check_branch
      %17 = sbr.rel (0) target = $region5
    $region4: #{tpu_custom_call.1} parent=1 // pred_region
      %s19 = ssub.s32 4096, 4096
      %20 = vsyncadd [#allocation4], %s19
      %s21 = sshll.u32 [#allocation3], 4
      %s22 = int_to_ptr.vmem [resolvable:$true] %s21
      %27 = dma.hbm_to_vmem [thread:$0]  %s0, 4096, %s22, [#allocation4], 128, 128, 8
    $region5: #{tpu_custom_call.1} parent=1 // pred_fallthru
      _
    // Predicated region
    $region6: #{tpu_custom_call.1} parent=1 // pred_check
      _
    $region7: #{tpu_custom_call.1} parent=1 // pred_check_branch
      %29 = sbr.rel (0) target = $region9
    $region8: #{tpu_custom_call.1} parent=1 // pred_region
      _
    $region9: #{tpu_custom_call.1} parent=1 // pred_fallthru
      _
    // Predicated region
    $region10: #{tpu_custom_call.1} parent=1 // pred_check
      _
    $region11: #{tpu_custom_call.1} parent=1 // pred_check_branch
      %31 = sbr.rel (0) target = $region13
    $region12: #{tpu_custom_call.1} parent=1 // pred_region
      _
    $region13: #{tpu_custom_call.1} parent=1 // pred_fallthru
      _
    // Predicated region
    $region14: #{tpu_custom_call.1} parent=1 // pred_check
      _
    $region15: #{tpu_custom_call.1} parent=1 // pred_check_branch
      %33 = sbr.rel (0) target = $region17
    $region16: #{tpu_custom_call.1} parent=1 // pred_region
      _
    $region17: #{tpu_custom_call.1} parent=1 // pred_fallthru
      _
    // Predicated region
    $region18: #{tpu_custom_call.1} parent=1 // pred_check
      _
    $region19: #{tpu_custom_call.1} parent=1 // pred_check_branch
      %35 = sbr.rel (0) target = $region21
    $region20: #{tpu_custom_call.1} parent=1 // pred_region
      %36 = dma.done [#allocation4], 4096
    $region21: #{tpu_custom_call.1} parent=1 // pred_fallthru
      _
    %v37 = vld [vmem:[#allocation3] sm:$0xff]
    %v38 = vld [vmem:[#allocation3 + $0x8] sm:$0xff]
    %v39 = vld [vmem:[#allocation3 + $0x10] sm:$0xff]
    %v40 = vld [vmem:[#allocation3 + $0x18] sm:$0xff]
    %v41 = vld [vmem:[#allocation3 + $0x20] sm:$0xff]
    %v42 = vld [vmem:[#allocation3 + $0x28] sm:$0xff]
    %v43 = vld [vmem:[#allocation3 + $0x30] sm:$0xff]
    %v44 = vld [vmem:[#allocation3 + $0x38] sm:$0xff]
    %v45 = vld [vmem:[#allocation3 + $0x40] sm:$0xff]
    %v46 = vld [vmem:[#allocation3 + $0x48] sm:$0xff]
    %v47 = vld [vmem:[#allocation3 + $0x50] sm:$0xff]
    %v48 = vld [vmem:[#allocation3 + $0x58] sm:$0xff]
    %v49 = vld [vmem:[#allocation3 + $0x60] sm:$0xff]
    %v50 = vld [vmem:[#allocation3 + $0x68] sm:$0xff]
    %v51 = vld [vmem:[#allocation3 + $0x70] sm:$0xff]
    %v52 = vld [vmem:[#allocation3 + $0x78] sm:$0xff]
    %v53 = vld [vmem:[#allocation3 + $0x80] sm:$0xff]
    %v54 = vld [vmem:[#allocation3 + $0x88] sm:$0xff]
    %v55 = vld [vmem:[#allocation3 + $0x90] sm:$0xff]
    %v56 = vld [vmem:[#allocation3 + $0x98] sm:$0xff]
    %v57 = vld [vmem:[#allocation3 + $0xa0] sm:$0xff]
    %v58 = vld [vmem:[#allocation3 + $0xa8] sm:$0xff]
    %v59 = vld [vmem:[#allocation3 + $0xb0] sm:$0xff]
    %v60 = vld [vmem:[#allocation3 + $0xb8] sm:$0xff]
    %v61 = vld [vmem:[#allocation3 + $0xc0] sm:$0xff]
    %v62 = vld [vmem:[#allocation3 + $0xc8] sm:$0xff]
    %v63 = vld [vmem:[#allocation3 + $0xd0] sm:$0xff]
    %v64 = vld [vmem:[#allocation3 + $0xd8] sm:$0xff]
    %v65 = vld [vmem:[#allocation3 + $0xe0] sm:$0xff]
    %v66 = vld [vmem:[#allocation3 + $0xe8] sm:$0xff]
    %v67 = vld [vmem:[#allocation3 + $0xf0] sm:$0xff]
    %v68 = vld [vmem:[#allocation3 + $0xf8] sm:$0xff]
    %v69 = vld [vmem:[%s1] sm:$0xff]
    %v70 = vlaneseq
    %v71 = vand.u32 %v70, 127
    %v72 = vadd.s32 %v71, 128
    %73 = vset.pattern.permute.xlu0 0
    %74 = vperm.xlu0 %73, %v69
    %v75 = vpop.permute.xlu0 %74
    %vm76 = vcmp.eq.s32.totalorder %v75, %v71
    %vm77 = vcmp.eq.s32.totalorder %v75, %v72
    %v78 = vsel %vm76, 1, 0
    %v79 = vsel %vm77, 1, 0
    %v80 = vcvt.s32.f32 %v78
    %v81 = vcvt.s32.f32 %v79
    %v82 = vadd.f32 %v80, 0.0
    %v83 = vadd.f32 %v81, 0.0
    %84 = vset.pattern.permute.xlu0 1
    %85 = vperm.xlu0 %84, %v69
    %v86 = vpop.permute.xlu0 %85
    %vm87 = vcmp.eq.s32.totalorder %v86, %v71
    %vm88 = vcmp.eq.s32.totalorder %v86, %v72
    %v89 = vsel %vm87, 1, 0
    %v90 = vsel %vm88, 1, 0
    %v91 = vcvt.s32.f32 %v89
    %v92 = vcvt.s32.f32 %v90
    %v93 = vadd.f32 %v82, %v91
    %v94 = vadd.f32 %v83, %v92
    %95 = vset.pattern.permute.xlu0 2
    %96 = vperm.xlu0 %95, %v69
    %v97 = vpop.permute.xlu0 %96
    %vm98 = vcmp.eq.s32.totalorder %v97, %v71
    %vm99 = vcmp.eq.s32.totalorder %v97, %v72
    %v100 = vsel %vm98, 1, 0
    %v101 = vsel %vm99, 1, 0
    %v102 = vcvt.s32.f32 %v100
    %v103 = vcvt.s32.f32 %v101
    %v104 = vadd.f32 %v93, %v102
    %v105 = vadd.f32 %v94, %v103
    %106 = vset.pattern.permute.xlu0 3
    %107 = vperm.xlu0 %106, %v69
    %v108 = vpop.permute.xlu0 %107
    %vm109 = vcmp.eq.s32.totalorder %v108, %v71
    %vm110 = vcmp.eq.s32.totalorder %v108, %v72
    %v111 = vsel %vm109, 1, 0
    %v112 = vsel %vm110, 1, 0
    %v113 = vcvt.s32.f32 %v111
    %v114 = vcvt.s32.f32 %v112
    %v115 = vadd.f32 %v104, %v113
    %v116 = vadd.f32 %v105, %v114
    %117 = vset.pattern.permute.xlu0 4
    %118 = vperm.xlu0 %117, %v69
    %v119 = vpop.permute.xlu0 %118
    %vm120 = vcmp.eq.s32.totalorder %v119, %v71
    %vm121 = vcmp.eq.s32.totalorder %v119, %v72
    %v122 = vsel %vm120, 1, 0
    %v123 = vsel %vm121, 1, 0
    %v124 = vcvt.s32.f32 %v122
    %v125 = vcvt.s32.f32 %v123
    %v126 = vadd.f32 %v115, %v124
    %v127 = vadd.f32 %v116, %v125
    %128 = vset.pattern.permute.xlu0 5
    %129 = vperm.xlu0 %128, %v69
    %v130 = vpop.permute.xlu0 %129
    %vm131 = vcmp.eq.s32.totalorder %v130, %v71
    %vm132 = vcmp.eq.s32.totalorder %v130, %v72
    %v133 = vsel %vm131, 1, 0
    %v134 = vsel %vm132, 1, 0
    %v135 = vcvt.s32.f32 %v133
    %v136 = vcvt.s32.f32 %v134
    %v137 = vadd.f32 %v126, %v135
    %v138 = vadd.f32 %v127, %v136
    %139 = vset.pattern.permute.xlu0 6
    %140 = vperm.xlu0 %139, %v69
    %v141 = vpop.permute.xlu0 %140
    %vm142 = vcmp.eq.s32.totalorder %v141, %v71
    %vm143 = vcmp.eq.s32.totalorder %v141, %v72
    %v144 = vsel %vm142, 1, 0
    %v145 = vsel %vm143, 1, 0
    %v146 = vcvt.s32.f32 %v144
    %v147 = vcvt.s32.f32 %v145
    %v148 = vadd.f32 %v137, %v146
    %v149 = vadd.f32 %v138, %v147
    %150 = vset.pattern.permute.xlu0 7
    %151 = vperm.xlu0 %150, %v69
    %v152 = vpop.permute.xlu0 %151
    %vm153 = vcmp.eq.s32.totalorder %v152, %v71
    %vm154 = vcmp.eq.s32.totalorder %v152, %v72
    %v155 = vsel %vm153, 1, 0
    %v156 = vsel %vm154, 1, 0
    %v157 = vcvt.s32.f32 %v155
    %v158 = vcvt.s32.f32 %v156
    %v159 = vadd.f32 %v148, %v157
    %v160 = vadd.f32 %v149, %v158
    %161 = vmatprep.subr.mxu0 0.0
    %162 = vmatpush1.msra.mxu0 %v52
    %163 = vmatprep.subr.mxu0 0.0
    %164 = vmatpush1.msra.mxu0 %v51
    %165 = vmatprep.subr.mxu0 0.0
    %166 = vmatpush1.msra.mxu0 %v50
    %167 = vmatprep.subr.mxu0 0.0
    %168 = vmatpush1.msra.mxu0 %v49
    %169 = vmatprep.subr.mxu0 0.0
    %170 = vmatpush1.msra.mxu0 %v48
    %171 = vmatprep.subr.mxu0 0.0
    %172 = vmatpush1.msra.mxu0 %v47
    %173 = vmatprep.subr.mxu0 0.0
    %174 = vmatpush1.msra.mxu0 %v46
    %175 = vmatprep.subr.mxu0 0.0
    %176 = vmatpush1.msra.mxu0 %v45
    %177 = vmatprep.subr.mxu0 0.0
    %178 = vmatpush1.msra.mxu0 %v44
    %179 = vmatprep.subr.mxu0 0.0
    %180 = vmatpush1.msra.mxu0 %v43
    %181 = vmatprep.subr.mxu0 0.0
    %182 = vmatpush1.msra.mxu0 %v42
    %183 = vmatprep.subr.mxu0 0.0
    %184 = vmatpush1.msra.mxu0 %v41
    %185 = vmatprep.subr.mxu0 0.0
    %186 = vmatpush1.msra.mxu0 %v40
    %187 = vmatprep.subr.mxu0 0.0
    %188 = vmatpush1.msra.mxu0 %v39
    %189 = vmatprep.subr.mxu0 0.0
    %190 = vmatpush1.msra.mxu0 %v38
    %191 = vmatprep.subr.mxu0 0.0
    %192 = vmatpush1.msra.mxu0 %v37
    %193 = vmatprep.subr.mxu0 0.0
    %194 = vmatpush2.msra.mxu0 %v68
    %195 = vmatprep.subr.mxu0 0.0
    %196 = vmatpush2.msra.mxu0 %v67
    %197 = vmatprep.subr.mxu0 0.0
    %198 = vmatpush2.msra.mxu0 %v66
    %199 = vmatprep.subr.mxu0 0.0
    %200 = vmatpush2.msra.mxu0 %v65
    %201 = vmatprep.subr.mxu0 0.0
    %202 = vmatpush2.msra.mxu0 %v64
    %203 = vmatprep.subr.mxu0 0.0
    %204 = vmatpush2.msra.mxu0 %v63
    %205 = vmatprep.subr.mxu0 0.0
    %206 = vmatpush2.msra.mxu0 %v62
    %207 = vmatprep.subr.mxu0 0.0
    %208 = vmatpush2.msra.mxu0 %v61
    %209 = vmatprep.subr.mxu0 0.0
    %210 = vmatpush2.msra.mxu0 %v60
    %211 = vmatprep.subr.mxu0 0.0
    %212 = vmatpush2.msra.mxu0 %v59
    %213 = vmatprep.subr.mxu0 0.0
    %214 = vmatpush2.msra.mxu0 %v58
    %215 = vmatprep.subr.mxu0 0.0
    %216 = vmatpush2.msra.mxu0 %v57
    %217 = vmatprep.subr.mxu0 0.0
    %218 = vmatpush2.msra.mxu0 %v56
    %219 = vmatprep.subr.mxu0 0.0
    %220 = vmatpush2.msra.mxu0 %v55
    %221 = vmatprep.subr.mxu0 0.0
    %222 = vmatpush2.msra.mxu0 %v54
    %223 = vmatprep.subr.mxu0 0.0
    %224 = vmatpush2.msra.mxu0 %v53
    %225 = vmatprep.mubr.f32.mxu0 %v160
    %226 = vmatmul.mubr.f32.gmra.mxu0 %v159
    %v227 = vpop.f32.mrf.mxu0
    %v228 = vadd.f32 0.0, %v227
    %v229 = vpop.f32.mrf.mxu0
    %230 = vdwg.mxu0
    %v231 = vmul.f32 %v228, 0.125
    %v232 = vld [vmem:[#allocation2] sm:$0x1]
    %233 = vset.pattern.permute.xlu0 0
    %234 = vperm.xlu0 %233, %v232
    %v235 = vpop.permute.xlu0 %234
    %v236 = vlaneseq
    %v237 = vshrl.u32 %v236, 7
    %v238 = vsub.s32 0, %v237
    %v239 = vrot.slane %v235, %v238
    %vm240 = vcmp.eq.s32.totalorder %v239, %v71
    %vm241 = vcmp.eq.s32.totalorder %v239, %v72
    %v242 = vsel %vm240, 1, 0
    %v243 = vsel %vm241, 1, 0
    %v244 = vcvt.s32.f32 %v242
    %v245 = vcvt.s32.f32 %v243
    %246 = vmatprep.subr.mxu0 0.0
    %247 = vmatpush1.msra.mxu0 %v52
    %248 = vmatprep.subr.mxu0 0.0
    %249 = vmatpush1.msra.mxu0 %v51
    %250 = vmatprep.subr.mxu0 0.0
    %251 = vmatpush1.msra.mxu0 %v50
    %252 = vmatprep.subr.mxu0 0.0
    %253 = vmatpush1.msra.mxu0 %v49
    %254 = vmatprep.subr.mxu0 0.0
    %255 = vmatpush1.msra.mxu0 %v48
    %256 = vmatprep.subr.mxu0 0.0
    %257 = vmatpush1.msra.mxu0 %v47
    %258 = vmatprep.subr.mxu0 0.0
    %259 = vmatpush1.msra.mxu0 %v46
    %260 = vmatprep.subr.mxu0 0.0
    %261 = vmatpush1.msra.mxu0 %v45
    %262 = vmatprep.subr.mxu0 0.0
    %263 = vmatpush1.msra.mxu0 %v44
    %264 = vmatprep.subr.mxu0 0.0
    %265 = vmatpush1.msra.mxu0 %v43
    %266 = vmatprep.subr.mxu0 0.0
    %267 = vmatpush1.msra.mxu0 %v42
    %268 = vmatprep.subr.mxu0 0.0
    %269 = vmatpush1.msra.mxu0 %v41
    %270 = vmatprep.subr.mxu0 0.0
    %271 = vmatpush1.msra.mxu0 %v40
    %272 = vmatprep.subr.mxu0 0.0
    %273 = vmatpush1.msra.mxu0 %v39
    %274 = vmatprep.subr.mxu0 0.0
    %275 = vmatpush1.msra.mxu0 %v38
    %276 = vmatprep.subr.mxu0 0.0
    %277 = vmatpush1.msra.mxu0 %v37
    %278 = vmatprep.subr.mxu0 0.0
    %279 = vmatpush2.msra.mxu0 %v68
    %280 = vmatprep.subr.mxu0 0.0
    %281 = vmatpush2.msra.mxu0 %v67
    %282 = vmatprep.subr.mxu0 0.0
    %283 = vmatpush2.msra.mxu0 %v66
    %284 = vmatprep.subr.mxu0 0.0
    %285 = vmatpush2.msra.mxu0 %v65
    %286 = vmatprep.subr.mxu0 0.0
    %287 = vmatpush2.msra.mxu0 %v64
    %288 = vmatprep.subr.mxu0 0.0
    %289 = vmatpush2.msra.mxu0 %v63
    %290 = vmatprep.subr.mxu0 0.0
    %291 = vmatpush2.msra.mxu0 %v62
    %292 = vmatprep.subr.mxu0 0.0
    %293 = vmatpush2.msra.mxu0 %v61
    %294 = vmatprep.subr.mxu0 0.0
    %295 = vmatpush2.msra.mxu0 %v60
    %296 = vmatprep.subr.mxu0 0.0
    %297 = vmatpush2.msra.mxu0 %v59
    %298 = vmatprep.subr.mxu0 0.0
    %299 = vmatpush2.msra.mxu0 %v58
    %300 = vmatprep.subr.mxu0 0.0
    %301 = vmatpush2.msra.mxu0 %v57
    %302 = vmatprep.subr.mxu0 0.0
    %303 = vmatpush2.msra.mxu0 %v56
    %304 = vmatprep.subr.mxu0 0.0
    %305 = vmatpush2.msra.mxu0 %v55
    %306 = vmatprep.subr.mxu0 0.0
    %307 = vmatpush2.msra.mxu0 %v54
    %308 = vmatprep.subr.mxu0 0.0
    %309 = vmatpush2.msra.mxu0 %v53
    %310 = vmatprep.mubr.f32.mxu0 %v245
    %311 = vmatmul.mubr.f32.gmra.mxu0 %v244
    %v312 = vpop.f32.mrf.mxu0
    %v313 = vadd.f32 0.0, %v312
    %v314 = vpop.f32.mrf.mxu0
    %315 = vdwg.mxu0
    %v316 = vld [vmem:[%s3] sm:$0xff]
    %317 = vset.pattern.permute.xlu0 0
    %318 = vperm.xlu0 %317, %v316
    %v319 = vpop.permute.xlu0 %318
    %vm320 = vcmp.eq.s32.totalorder %v319, %v71
    %vm321 = vcmp.eq.s32.totalorder %v319, %v72
    %v322 = vsel %vm320, 1, 0
    %v323 = vsel %vm321, 1, 0
    %v324 = vcvt.s32.f32 %v322
    %v325 = vcvt.s32.f32 %v323
    %326 = vmatprep.subr.mxu0 0.0
    %327 = vmatpush1.msra.mxu0 %v52
    %328 = vmatprep.subr.mxu0 0.0
    %329 = vmatpush1.msra.mxu0 %v51
    %330 = vmatprep.subr.mxu0 0.0
    %331 = vmatpush1.msra.mxu0 %v50
    %332 = vmatprep.subr.mxu0 0.0
    %333 = vmatpush1.msra.mxu0 %v49
    %334 = vmatprep.subr.mxu0 0.0
    %335 = vmatpush1.msra.mxu0 %v48
    %336 = vmatprep.subr.mxu0 0.0
    %337 = vmatpush1.msra.mxu0 %v47
    %338 = vmatprep.subr.mxu0 0.0
    %339 = vmatpush1.msra.mxu0 %v46
    %340 = vmatprep.subr.mxu0 0.0
    %341 = vmatpush1.msra.mxu0 %v45
    %342 = vmatprep.subr.mxu0 0.0
    %343 = vmatpush1.msra.mxu0 %v44
    %344 = vmatprep.subr.mxu0 0.0
    %345 = vmatpush1.msra.mxu0 %v43
    %346 = vmatprep.subr.mxu0 0.0
    %347 = vmatpush1.msra.mxu0 %v42
    %348 = vmatprep.subr.mxu0 0.0
    %349 = vmatpush1.msra.mxu0 %v41
    %350 = vmatprep.subr.mxu0 0.0
    %351 = vmatpush1.msra.mxu0 %v40
    %352 = vmatprep.subr.mxu0 0.0
    %353 = vmatpush1.msra.mxu0 %v39
    %354 = vmatprep.subr.mxu0 0.0
    %355 = vmatpush1.msra.mxu0 %v38
    %356 = vmatprep.subr.mxu0 0.0
    %357 = vmatpush1.msra.mxu0 %v37
    %358 = vmatprep.subr.mxu0 0.0
    %359 = vmatpush2.msra.mxu0 %v68
    %360 = vmatprep.subr.mxu0 0.0
    %361 = vmatpush2.msra.mxu0 %v67
    %362 = vmatprep.subr.mxu0 0.0
    %363 = vmatpush2.msra.mxu0 %v66
    %364 = vmatprep.subr.mxu0 0.0
    %365 = vmatpush2.msra.mxu0 %v65
    %366 = vmatprep.subr.mxu0 0.0
    %367 = vmatpush2.msra.mxu0 %v64
    %368 = vmatprep.subr.mxu0 0.0
    %369 = vmatpush2.msra.mxu0 %v63
    %370 = vmatprep.subr.mxu0 0.0
    %371 = vmatpush2.msra.mxu0 %v62
    %372 = vmatprep.subr.mxu0 0.0
    %373 = vmatpush2.msra.mxu0 %v61
    %374 = vmatprep.subr.mxu0 0.0
    %375 = vmatpush2.msra.mxu0 %v60
    %376 = vmatprep.subr.mxu0 0.0
    %377 = vmatpush2.msra.mxu0 %v59
    %378 = vmatprep.subr.mxu0 0.0
    %379 = vmatpush2.msra.mxu0 %v58
    %380 = vmatprep.subr.mxu0 0.0
    %381 = vmatpush2.msra.mxu0 %v57
    %382 = vmatprep.subr.mxu0 0.0
    %383 = vmatpush2.msra.mxu0 %v56
    %384 = vmatprep.subr.mxu0 0.0
    %385 = vmatpush2.msra.mxu0 %v55
    %386 = vmatprep.subr.mxu0 0.0
    %387 = vmatpush2.msra.mxu0 %v54
    %388 = vmatprep.subr.mxu0 0.0
    %389 = vmatpush2.msra.mxu0 %v53
    %390 = vmatprep.mubr.f32.mxu0 %v325
    %391 = vmatmul.mubr.f32.gmra.mxu0 %v324
    %v392 = vpop.f32.mrf.mxu0
    %v393 = vadd.f32 0.0, %v392
    %v394 = vpop.f32.mrf.mxu0
    %395 = vdwg.mxu0
    %v396 = vmul.f32 %v231, %v231
    %397 = vadd.xlane.f32.xlu0 %v396
    %v398 = vpop.xlane.xlu0 %397
    %v399 = vrsqrt.pop %v398
    %v400 = vmul.f32 %v398, %v399
    %vm401 = vcmp.eq.f32.partialorder %v398, inf
    %v402 = vsel %vm401, %v398, %v400
    %vm403 = vcmp.eq.f32.partialorder %v398, 0.0
    %v404 = vand.u32 %v398, 2147483648
    %v405 = vsel %vm403, %v404, %v402
    %v406 = vmax.f32 %v405, 1e-08
    %v407 = vlaneseq
    %v408 = vshrl.u32 %v407, 7
    %v409 = vsub.s32 0, %v408
    %v410 = vrot.slane %v313, %v409
    %v411 = vsub.f32 %v410, %v393
    %v412 = vmul.f32 %v411, 0.125
    %v413 = vadd.f32 %v231, %v412
    %v414 = vmul.f32 %v231, %v413
    %415 = vadd.xlane.f32.xlu0 %v414
    %v416 = vpop.xlane.xlu0 %415
    %v417 = vmul.f32 %v413, %v413
    %418 = vadd.xlane.f32.xlu0 %v417
    %v419 = vpop.xlane.xlu0 %418
    %v420 = vrsqrt.pop %v419
    %v421 = vmul.f32 %v419, %v420
    %vm422 = vcmp.eq.f32.partialorder %v419, inf
    %v423 = vsel %vm422, %v419, %v421
    %vm424 = vcmp.eq.f32.partialorder %v419, 0.0
    %v425 = vand.u32 %v419, 2147483648
    %v426 = vsel %vm424, %v425, %v423
    %v427 = vmax.f32 %v426, 1e-08
    %vm428 = vcmp.eq.s32.totalorder %v71, 0
    %v429 = vmul.f32 %v406, %v427
    %v430 = vrcp.pop %v429
    %v431 = vmul.f32 %v416, %v430
    %v432 = vsel %vm428, %v431, 0.0
    %433 = vst [vmem:[#allocation6] sm:$0xff] %v432
    %vm434 = vcmp.ge.f32.partialorder %v432, 0.85
    %v435 = vsel %vm434, 1, 0
    %v436 = vrot.slane %v435, 4
    %vm437 = vcmp.lt.s32.totalorder %v435, %v436
    %v438 = vsel %vm437, %v435, %v436
    %v439 = vrot.slane %v438, 2
    %vm440 = vcmp.lt.s32.totalorder %v438, %v439
    %v441 = vsel %vm440, %v438, %v439
    %v442 = vrot.slane %v441, 1
    %vm443 = vcmp.lt.s32.totalorder %v441, %v442
    %v444 = vsel %vm443, %v441, %v442
    %445 = vst [vmem:[#allocation7] sm:$0x1] %v444
    // Predicated region
    $region22: #{tpu_custom_call.1} parent=1 // pred_check
      _
    $region23: #{tpu_custom_call.1} parent=1 // pred_check_branch
      %447 = sbr.rel (0) target = $region25
    $region24: #{tpu_custom_call.1} parent=1 // pred_region
      %s449 = ssub.s32 128, 128
      %450 = vsyncadd [#allocation5], %s449
      %s452 = sshll.u32 [#allocation6], 4
      %s453 = int_to_ptr.vmem [resolvable:$true] %s452
      %455 = dma.vmem_to_hbm [thread:$0]  %s453, 128, %s4, [#allocation5]
    $region25: #{tpu_custom_call.1} parent=1 // pred_fallthru
      _
    // Predicated region
    $region26: #{tpu_custom_call.1} parent=1 // pred_check
      _
    $region27: #{tpu_custom_call.1} parent=1 // pred_check_branch
      %457 = sbr.rel (0) target = $region29
    $region28: #{tpu_custom_call.1} parent=1 // pred_region
      %s459 = ssub.s32 16, 16
      %460 = vsyncadd [#allocation8], %s459
      %s462 = sshll.u32 [#allocation7], 4
      %s463 = int_to_ptr.vmem [resolvable:$true] %s462
      %465 = dma.vmem_to_hbm [thread:$0]  %s463, 16, %s5, [#allocation8]
    $region29: #{tpu_custom_call.1} parent=1 // pred_fallthru
      _
    // Predicated region
    $region30: #{tpu_custom_call.1} parent=1 // pred_check
      _
    $region31: #{tpu_custom_call.1} parent=1 // pred_check_branch
      %467 = sbr.rel (0) target = $region33
    $region32: #{tpu_custom_call.1} parent=1 // pred_region
      %468 = dma.done [#allocation5], 128
    $region33: #{tpu_custom_call.1} parent=1 // pred_fallthru
      _
    // Predicated region
    $region34: #{tpu_custom_call.1} parent=1 // pred_check
      _
    $region35: #{tpu_custom_call.1} parent=1 // pred_check_branch
      %470 = sbr.rel (0) target = $region37
    $region36: #{tpu_custom_call.1} parent=1 // pred_region
      %471 = dma.done [#allocation8], 16
    $region37: #{tpu_custom_call.1} parent=1 // pred_fallthru
      _
    %472 = vsyncpa [#allocation4], 1
    %473 = vsyncpa [#allocation5], 1
    %474 = vsyncpa [#allocation8], 1

</llo_original>
